<compile_context>
chip_gen: v6e
topology: v6e:2x2x1
jax: 0.10.0
libtpu: 0.0.40
codegen_flags: <defaults>
</compile_context>

<pallas_src>
import functools

import jax
import jax.numpy as jnp
from jax.experimental import pallas as pl
from jax.experimental.pallas import tpu as pltpu


def _round_up(a, b):
    return (a + b - 1) // b * b


def dqn_kernel(x_ref, y_ref, wx_ref, wy_ref, b2v_ref, b2a_ref,
               wov_ref, woa_ref, bias_ref, out_ref, *, precision=None):
    """One batch tile.

    x_ref:   [Nb, H]
    y_ref:   [Nb, K*A]        lane-dense repack of y
    wx_ref:  [H, VCOL + K*H]  cols [0,H)=fc2_value.T, cols [VCOL,...)=K-tiled fc2_adv x-part
    wy_ref:  [K*A, K*H]       K-block-diagonal fc2_advantage y-part
    b2v_ref: [1, H]           fc2_value bias
    b2a_ref: [1, K*H]         K-tiled fc2_advantage bias
    wov_ref: [1, H]           out_value weight
    woa_ref: [K*H, KP]        K-block-diagonal out_advantage weight (lane-padded to KP>=128)
    bias_ref:[1, 2]  (SMEM)   [out_value.bias, out_advantage.bias]
    out_ref: [K, Nb]          lane-dense (batch on lanes), transposed back in wrapper
    """
    H = wov_ref.shape[1]
    KH = wy_ref.shape[1]
    VCOL = wx_ref.shape[1] - KH
    K = out_ref.shape[0]

    x = x_ref[...]                                                       # [Nb, H]
    y = y_ref[...]                                                       # [Nb, K*A]

    # ---- single fused MXU matmul for all x-side projections ------------------
    #   cols [0:H)            -> fc2_value(x) pre-bias
    #   cols [VCOL:VCOL+K*H)  -> K-tiled x-part of fc2_advantage (128-aligned slice)
    hx = jnp.dot(x, wx_ref[...], preferred_element_type=jnp.float32,
                 precision=precision)                                    # [Nb, VCOL+KH]

    # ---- value head -----------------------------------------------------------
    hv = jnp.maximum(hx[:, :H] + b2v_ref[...], 0.0)                      # [Nb, H]
    v = (jnp.sum(hv * wov_ref[...], axis=-1, keepdims=True)
         + bias_ref[0, 0])                                               # [Nb, 1]

    # ---- advantage head (fully 2D, lane-dense) --------------------------------
    hy = jnp.dot(y, wy_ref[...], preferred_element_type=jnp.float32,
                 precision=precision)                                    # [Nb, KH]
    ha = jnp.maximum(hy + hx[:, VCOL:] + b2a_ref[...], 0.0)              # [Nb, KH]
    adv = (jnp.dot(ha, woa_ref[...],
                   preferred_element_type=jnp.float32)[:, :K]
           + bias_ref[0, 1])                                             # [Nb, K]

    # ---- dueling combine (choose_action=True) ----------------------------------
    qsa = adv + v - jnp.mean(adv, axis=1, keepdims=True)                 # [Nb, K]

    # lane-dense store: batch on lanes, K on sublanes
    out_ref[...] = qsa.T.astype(out_ref.dtype)                           # [K, Nb]


def dqn_forward(x, y, params, *, block_n=1024, mxu_dtype=jnp.bfloat16,
                precision=None, transpose_out=True):
    """x: [N, H] f32, y: [N, K, A] f32 -> qsa [N, K] f32 (or [K, N] if transpose_out=False).

    mxu_dtype: dtype of the MXU matmul inputs (x, y, fc2 weights). Default bf16:
      the fast path on v6e/v7x (f32 accumulation / relu / reductions throughout).
      Pass None for the f32 path. `precision` (e.g. jax.lax.Precision.HIGHEST) is
      forwarded to the in-kernel dots for callers needing full f32 matmul accuracy.
    """
    N, H = x.shape
    K, A = y.shape[1], y.shape[2]
    w2v, b2v, wov, bov, w2a, b2a, woa, boa = params

    # ---- weight prep (plain JAX glue, outside the kernel) ----
    VCOL = _round_up(H, 128)          # 128-aligned start of the advantage block
    KH = K * H
    KP = _round_up(K, 128)            # lane-padded width of the out_advantage matmul

    # fused x-side weight: cols [0,H)=fc2_value.T; cols [VCOL,VCOL+K*H)=K-tiled fc2_adv x-part
    wx = jnp.zeros((H, VCOL + KH), jnp.float32)
    wx = wx.at[:, :H].set(w2v.T)
    wx = wx.at[:, VCOL:].set(jnp.tile(w2a[:, :H].T, (1, K)))
    # K-block-diagonal y-side fc2_advantage weight: [K*A, K*H]
    eyeK = jnp.eye(K, dtype=jnp.float32)
    wya = w2a[:, H:].T                                                   # [A, H]
    wy_blk = (eyeK[:, None, :, None] * wya[None, :, None, :]).reshape(K * A, KH)
    # K-block-diagonal out_advantage weight, lane-padded: [K*H, KP]
    woa_blk = jnp.zeros((KH, KP), jnp.float32)
    woa_blk = woa_blk.at[:, :K].set(
        (eyeK[:, None, :] * woa.reshape(H)[None, :, None]).reshape(KH, K))

    if mxu_dtype is not None:
        x = x.astype(mxu_dtype)
        y = y.astype(mxu_dtype)
        wx = wx.astype(mxu_dtype)
        wy_blk = wy_blk.astype(mxu_dtype)
    b2v_2d = b2v.reshape(1, H).astype(jnp.float32)
    b2a_t = jnp.tile(b2a.reshape(1, H), (1, K)).astype(jnp.float32)      # [1, K*H]
    wov_2d = wov.reshape(1, H).astype(jnp.float32)
    bias_sc = jnp.stack([bov.reshape(()), boa.reshape(())]).reshape(1, 2).astype(jnp.float32)

    # ---- batch tiling: big lane-dense tiles; >=2 grid steps once N > 128 ----
    if N <= 128:
        Nb = _round_up(N, 8)                  # single tile (== full padded extent)
    else:
        # multiple of 128 -> unmasked full-width stores; capped at ceil(N/2) so the
        # "parallel" batch axis always has >= 2 steps (both v7x TensorCores busy).
        Nb = min(_round_up(block_n, 128), _round_up(-(-N // 2), 128))
    Np = _round_up(N, Nb)
    if Np != N:                               # zero-pad batch; padded rows sliced off below
        x = jnp.pad(x, ((0, Np - N), (0, 0)))
        y = jnp.pad(y, ((0, Np - N), (0, 0), (0, 0)))
    y2 = y.reshape(Np, K * A)                 # lane-dense y repack (free, row-major reshape)
    num_tiles = Np // Nb

    resident = lambda i: (0, 0)               # constant block index -> weights stay in VMEM
    elem_b = jnp.dtype(mxu_dtype if mxu_dtype is not None else jnp.float32).itemsize
    cost = pl.CostEstimate(
        flops=int(2 * Np * H * (VCOL + KH) + 2 * Np * (K * A) * KH
                  + 2 * Np * KH * KP + 6 * Np * KH),
        transcendentals=0,
        bytes_accessed=int(elem_b * (Np * H + Np * K * A + H * (VCOL + KH) + K * A * KH)
                           + 4 * (KH * KP + KH + 2 * H + 2 + K * Np)),
    )

    kernel = functools.partial(dqn_kernel, precision=precision)
    out_t = pl.pallas_call(
        kernel,
        out_shape=jax.ShapeDtypeStruct((K, Np), jnp.float32),
        grid=(num_tiles,),
        in_specs=[
            pl.BlockSpec((Nb, H), lambda i: (i, 0)),              # x tile
            pl.BlockSpec((Nb, K * A), lambda i: (i, 0)),          # y tile (lane-dense)
            pl.BlockSpec((H, VCOL + KH), resident),               # fused x-side weight
            pl.BlockSpec((K * A, KH), resident),                  # block-diag y-side weight
            pl.BlockSpec((1, H), resident),                       # fc2_value bias
            pl.BlockSpec((1, KH), resident),                      # K-tiled fc2_advantage bias
            pl.BlockSpec((1, H), resident),                       # out_value weight
            pl.BlockSpec((KH, KP), resident),                     # block-diag out_advantage weight
            pl.BlockSpec((1, 2), resident,
                         memory_space=pltpu.MemorySpace.SMEM),    # [bov, boa] scalars
        ],
        out_specs=pl.BlockSpec((K, Nb), lambda i: (0, i)),        # lane-dense [K, Nb]
        compiler_params=pltpu.CompilerParams(
            dimension_semantics=("parallel",),
            vmem_limit_bytes=32 * 1024 * 1024),
        cost_estimate=cost,
    )(x, y2, wx, wy_blk, b2v_2d, b2a_t, wov_2d, woa_blk, bias_sc)

    out_t = out_t[:, :N]                                          # drop padded batch rows
    return out_t.T if transpose_out else out_t                    # [N, K] (or [K, N])


def dqn_reference(x, y, params):
    """Pure-JAX reference matching the PyTorch forward (choose_action=True)."""
    w2v, b2v, wov, bov, w2a, b2a, woa, boa = params
    N, H = x.shape
    K = y.shape[1]
    x3 = x[:, None, :]                                             # [N, 1, H]
    value = jnp.maximum(x3 @ w2v.T + b2v, 0.0) @ wov.T + bov       # [N, 1, 1]
    value = value[:, :, 0]                                         # [N, 1]
    x_rep = jnp.repeat(x3, K, axis=1)                              # [N, K, H]
    sca = jnp.concatenate([x_rep, y], axis=2)                      # [N, K, H+A]
    adv = jnp.maximum(sca @ w2a.T + b2a, 0.0) @ woa.T + boa        # [N, K, 1]
    adv = adv[:, :, 0]                                             # [N, K]
    return adv + value - jnp.mean(adv, axis=1, keepdims=True)


if __name__ == "__main__":
    # Small synthetic shapes consistent with the module.
    N, K = 2, 8            # batch, num candidate actions
    H, A = 32, 16          # hidden_size, action_size

    key = jax.random.PRNGKey(0)
    ks = jax.random.split(key, 10)
    x = jax.random.normal(ks[0], (N, H), dtype=jnp.float32)
    y = jax.random.normal(ks[1], (N, K, A), dtype=jnp.float32)

    scale = 0.1
    w2v = scale * jax.random.normal(ks[2], (H, H), dtype=jnp.float32)        # fc2_value.weight
    b2v = scale * jax.random.normal(ks[3], (H,), dtype=jnp.float32)          # fc2_value.bias
    wov = scale * jax.random.normal(ks[4], (1, H), dtype=jnp.float32)        # out_value.weight
    bov = scale * jax.random.normal(ks[5], (1,), dtype=jnp.float32)          # out_value.bias
    w2a = scale * jax.random.normal(ks[6], (H, H + A), dtype=jnp.float32)    # fc2_advantage.weight
    b2a = scale * jax.random.normal(ks[7], (H,), dtype=jnp.float32)          # fc2_advantage.bias
    woa = scale * jax.random.normal(ks[8], (1, H), dtype=jnp.float32)        # out_advantage.weight
    boa = scale * jax.random.normal(ks[9], (1,), dtype=jnp.float32)          # out_advantage.bias
    params = (w2v, b2v, wov, bov, w2a, b2a, woa, boa)

    ref = dqn_reference(x, y, params)

    # 1) f32-MXU-input path
    qsa_f32 = jax.block_until_ready(dqn_forward(x, y, params, mxu_dtype=None))
    assert qsa_f32.shape == (N, K)
    assert jnp.allclose(qsa_f32, ref, atol=1e-4, rtol=1e-4), "f32 kernel mismatch vs reference"

    # 2) default fast path (bf16 MXU inputs, f32 accumulation / elementwise)
    qsa = jax.block_until_ready(dqn_forward(x, y, params))
    assert jnp.allclose(qsa, ref, atol=5e-2, rtol=5e-2), "bf16 kernel mismatch vs reference"

    # 3) lane-major output option: [K, N], no wrapper-side transpose
    qsa_t = jax.block_until_ready(dqn_forward(x, y, params, transpose_out=False))
    assert qsa_t.shape == (K, N)
    assert jnp.allclose(qsa_t.T, qsa, atol=1e-6), "transpose_out=False mismatch"

    # 4) multi-tile batch grid (N=300 -> two 256-row tiles; padded rows dropped)
    N2 = 300
    x2 = jax.random.normal(ks[0], (N2, H), dtype=jnp.float32)
    y2 = jax.random.normal(ks[1], (N2, K, A), dtype=jnp.float32)
    r2 = dqn_reference(x2, y2, params)
    q2_f32 = jax.block_until_ready(dqn_forward(x2, y2, params, mxu_dtype=None))
    assert jnp.allclose(q2_f32, r2, atol=1e-4, rtol=1e-4), "tiled f32 kernel mismatch vs reference"
    q2 = jax.block_until_ready(dqn_forward(x2, y2, params))
    assert jnp.allclose(q2, r2, atol=5e-2, rtol=5e-2), "tiled bf16 kernel mismatch vs reference"

    print("KERNEL_OK")
</pallas_src>

<mosaic_0001>
module attributes {stable_mosaic.version = 11 : i64} {
  func.func @dqn_kernel(%arg0: i32, %arg1: memref<8x32xf32, #tpu.memory_space<vmem>>, %arg2: memref<8x128xf32, #tpu.memory_space<vmem>>, %arg3: memref<32x384xf32, #tpu.memory_space<vmem>>, %arg4: memref<128x256xf32, #tpu.memory_space<vmem>>, %arg5: memref<1x32xf32, #tpu.memory_space<vmem>>, %arg6: memref<1x256xf32, #tpu.memory_space<vmem>>, %arg7: memref<1x32xf32, #tpu.memory_space<vmem>>, %arg8: memref<256x128xf32, #tpu.memory_space<vmem>>, %arg9: memref<1x2xf32, #tpu.memory_space<smem>>, %arg10: memref<8x8xf32, #tpu.memory_space<vmem>>) attributes {dimension_semantics = [#tpu.dimension_semantics<parallel>], iteration_bounds = array<i64: 1>, scalar_prefetch = 0 : i64, scratch_operands = 0 : i64, tpu.core_type = #tpu.core_type<tc>, window_params = [{transform_indices = @transform_0, window_bounds = array<i64: 8, 32>}, {transform_indices = @transform_1, window_bounds = array<i64: 8, 128>}, {pipeline_mode = #tpu.pipeline_mode<synchronous>, transform_indices = @transform_2, window_bounds = array<i64: 32, 384>}, {pipeline_mode = #tpu.pipeline_mode<synchronous>, transform_indices = @transform_3, window_bounds = array<i64: 128, 256>}, {pipeline_mode = #tpu.pipeline_mode<synchronous>, transform_indices = @transform_4, window_bounds = array<i64: 1, 32>}, {pipeline_mode = #tpu.pipeline_mode<synchronous>, transform_indices = @transform_5, window_bounds = array<i64: 1, 256>}, {pipeline_mode = #tpu.pipeline_mode<synchronous>, transform_indices = @transform_6, window_bounds = array<i64: 1, 32>}, {pipeline_mode = #tpu.pipeline_mode<synchronous>, transform_indices = @transform_7, window_bounds = array<i64: 256, 128>}, {transform_indices = @transform_8, window_bounds = array<i64: 1, 2>}, {transform_indices = @transform_9, window_bounds = array<i64: 8, 8>}]} {
    %c0 = arith.constant 0 : index
    %c0_0 = arith.constant 0 : index
    %0 = vector.load %arg1[%c0, %c0_0] : memref<8x32xf32, #tpu.memory_space<vmem>>, vector<8x32xf32>
    %c0_1 = arith.constant 0 : index
    %c0_2 = arith.constant 0 : index
    %1 = vector.load %arg2[%c0_1, %c0_2] : memref<8x128xf32, #tpu.memory_space<vmem>>, vector<8x128xf32>
    %c0_3 = arith.constant 0 : index
    %c0_4 = arith.constant 0 : index
    %2 = vector.load %arg3[%c0_3, %c0_4] : memref<32x384xf32, #tpu.memory_space<vmem>>, vector<32x384xf32>
    %cst = arith.constant dense<0.000000e+00> : vector<8x384xf32>
    %3 = tpu.matmul %0, %2, %cst {dimension_numbers = #tpu.dot_dimension_numbers<[1], [0], [0], [1], [0, 0, 1, 1], [], []>} : vector<8x32xf32>, vector<32x384xf32>, vector<8x384xf32> -> vector<8x384xf32>
    %4 = vector.extract_strided_slice %3 {offsets = [0, 0], sizes = [8, 32], strides = [1, 1]} : vector<8x384xf32> to vector<8x32xf32>
    %c0_5 = arith.constant 0 : index
    %c0_6 = arith.constant 0 : index
    %5 = vector.load %arg5[%c0_5, %c0_6] : memref<1x32xf32, #tpu.memory_space<vmem>>, vector<1x32xf32>
    %6 = vector.broadcast %5 : vector<1x32xf32> to vector<8x32xf32>
    %7 = arith.addf %4, %6 : vector<8x32xf32>
    %cst_7 = arith.constant 0.000000e+00 : f32
    %8 = vector.broadcast %cst_7 : f32 to vector<8x32xf32>
    %9 = arith.maximumf %7, %8 : vector<8x32xf32>
    %c0_8 = arith.constant 0 : index
    %c0_9 = arith.constant 0 : index
    %10 = vector.load %arg7[%c0_8, %c0_9] : memref<1x32xf32, #tpu.memory_space<vmem>>, vector<1x32xf32>
    %11 = vector.broadcast %10 : vector<1x32xf32> to vector<8x32xf32>
    %12 = arith.mulf %9, %11 : vector<8x32xf32>
    %cst_10 = arith.constant dense<0.000000e+00> : vector<8xf32>
    %13 = vector.multi_reduction <add>, %12, %cst_10 [1] : vector<8x32xf32> to vector<8xf32>
    %14 = vector.shape_cast %13 : vector<8xf32> to vector<8x1xf32>
    %c0_11 = arith.constant 0 : index
    %c0_12 = arith.constant 0 : index
    %15 = memref.load %arg9[%c0_11, %c0_12] : memref<1x2xf32, #tpu.memory_space<smem>>
    %16 = vector.broadcast %15 : f32 to vector<8x1xf32>
    %17 = arith.addf %14, %16 : vector<8x1xf32>
    %c0_13 = arith.constant 0 : index
    %c0_14 = arith.constant 0 : index
    %18 = vector.load %arg4[%c0_13, %c0_14] : memref<128x256xf32, #tpu.memory_space<vmem>>, vector<128x256xf32>
    %cst_15 = arith.constant dense<0.000000e+00> : vector<8x256xf32>
    %19 = tpu.matmul %1, %18, %cst_15 {dimension_numbers = #tpu.dot_dimension_numbers<[1], [0], [0], [1], [0, 0, 1, 1], [], []>} : vector<8x128xf32>, vector<128x256xf32>, vector<8x256xf32> -> vector<8x256xf32>
    %20 = vector.extract_strided_slice %3 {offsets = [0, 128], sizes = [8, 256], strides = [1, 1]} : vector<8x384xf32> to vector<8x256xf32>
    %21 = arith.addf %19, %20 : vector<8x256xf32>
    %c0_16 = arith.constant 0 : index
    %c0_17 = arith.constant 0 : index
    %22 = vector.load %arg6[%c0_16, %c0_17] : memref<1x256xf32, #tpu.memory_space<vmem>>, vector<1x256xf32>
    %23 = vector.broadcast %22 : vector<1x256xf32> to vector<8x256xf32>
    %24 = arith.addf %21, %23 : vector<8x256xf32>
    %cst_18 = arith.constant 0.000000e+00 : f32
    %25 = vector.broadcast %cst_18 : f32 to vector<8x256xf32>
    %26 = arith.maximumf %24, %25 : vector<8x256xf32>
    %c0_19 = arith.constant 0 : index
    %c0_20 = arith.constant 0 : index
    %27 = vector.load %arg8[%c0_19, %c0_20] : memref<256x128xf32, #tpu.memory_space<vmem>>, vector<256x128xf32>
    %cst_21 = arith.constant dense<0.000000e+00> : vector<8x128xf32>
    %28 = tpu.matmul %26, %27, %cst_21 {dimension_numbers = #tpu.dot_dimension_numbers<[1], [0], [0], [1], [0, 0, 1, 1], [], []>} : vector<8x256xf32>, vector<256x128xf32>, vector<8x128xf32> -> vector<8x128xf32>
    %29 = vector.extract_strided_slice %28 {offsets = [0, 0], sizes = [8, 8], strides = [1, 1]} : vector<8x128xf32> to vector<8x8xf32>
    %c0_22 = arith.constant 0 : index
    %c1 = arith.constant 1 : index
    %30 = memref.load %arg9[%c0_22, %c1] : memref<1x2xf32, #tpu.memory_space<smem>>
    %31 = vector.broadcast %30 : f32 to vector<8x8xf32>
    %32 = arith.addf %29, %31 : vector<8x8xf32>
    %33 = vector.broadcast %17 : vector<8x1xf32> to vector<8x8xf32>
    %34 = arith.addf %32, %33 : vector<8x8xf32>
    %cst_23 = arith.constant dense<0.000000e+00> : vector<8xf32>
    %35 = vector.multi_reduction <add>, %32, %cst_23 [1] : vector<8x8xf32> to vector<8xf32>
    %36 = vector.shape_cast %35 : vector<8xf32> to vector<8x1xf32>
    %cst_24 = arith.constant 8.000000e+00 : f32
    %37 = vector.broadcast %cst_24 : f32 to vector<8x1xf32>
    %38 = arith.divf %36, %37 : vector<8x1xf32>
    %39 = vector.broadcast %38 : vector<8x1xf32> to vector<8x8xf32>
    %40 = arith.subf %34, %39 : vector<8x8xf32>
    %41 = tpu.transpose %40, [1, 0] : vector<8x8xf32> -> vector<8x8xf32>
    %c0_25 = arith.constant 0 : index
    %c0_26 = arith.constant 0 : index
    %42 = vector.load %arg10[%c0_25, %c0_26] : memref<8x8xf32, #tpu.memory_space<vmem>>, vector<8x8xf32>
    tpu.vector_store %arg10[%c0_25, %c0_26], %41 {strides = array<i32>} : memref<8x8xf32, #tpu.memory_space<vmem>>, vector<8x8xf32>,
    return
  }
  func.func @transform_0(%arg0: i32) -> (i32, i32) {
    %c0_i32 = arith.constant 0 : i32
    %c0_i32_0 = arith.constant 0 : i32
    return %arg0, %c0_i32 : i32, i32
  }
  func.func @transform_1(%arg0: i32) -> (i32, i32) {
    %c0_i32 = arith.constant 0 : i32
    %c0_i32_0 = arith.constant 0 : i32
    return %arg0, %c0_i32 : i32, i32
  }
  func.func @transform_2(%arg0: i32) -> (i32, i32) {
    %c0_i32 = arith.constant 0 : i32
    %c0_i32_0 = arith.constant 0 : i32
    %c0_i32_1 = arith.constant 0 : i32
    return %c0_i32, %c0_i32_0 : i32, i32
  }
  func.func @transform_3(%arg0: i32) -> (i32, i32) {
    %c0_i32 = arith.constant 0 : i32
    %c0_i32_0 = arith.constant 0 : i32
    %c0_i32_1 = arith.constant 0 : i32
    return %c0_i32, %c0_i32_0 : i32, i32
  }
  func.func @transform_4(%arg0: i32) -> (i32, i32) {
    %c0_i32 = arith.constant 0 : i32
    %c0_i32_0 = arith.constant 0 : i32
    %c0_i32_1 = arith.constant 0 : i32
    return %c0_i32, %c0_i32_0 : i32, i32
  }
  func.func @transform_5(%arg0: i32) -> (i32, i32) {
    %c0_i32 = arith.constant 0 : i32
    %c0_i32_0 = arith.constant 0 : i32
    %c0_i32_1 = arith.constant 0 : i32
    return %c0_i32, %c0_i32_0 : i32, i32
  }
  func.func @transform_6(%arg0: i32) -> (i32, i32) {
    %c0_i32 = arith.constant 0 : i32
    %c0_i32_0 = arith.constant 0 : i32
    %c0_i32_1 = arith.constant 0 : i32
    return %c0_i32, %c0_i32_0 : i32, i32
  }
  func.func @transform_7(%arg0: i32) -> (i32, i32) {
    %c0_i32 = arith.constant 0 : i32
    %c0_i32_0 = arith.constant 0 : i32
    %c0_i32_1 = arith.constant 0 : i32
    return %c0_i32, %c0_i32_0 : i32, i32
  }
  func.func @transform_8(%arg0: i32) -> (i32, i32) {
    %c0_i32 = arith.constant 0 : i32
    %c0_i32_0 = arith.constant 0 : i32
    %c0_i32_1 = arith.constant 0 : i32
    return %c0_i32, %c0_i32_0 : i32, i32
  }
  func.func @transform_9(%arg0: i32) -> (i32, i32) {
    %c0_i32 = arith.constant 0 : i32
    %c0_i32_0 = arith.constant 0 : i32
    return %c0_i32, %arg0 : i32, i32
  }
}

</mosaic_0001>

<llo_original>
// kernel: tpu_custom_call.1
$region0: #{tpu_custom_call.1}
  #allocation0 [shape = 'u32[]', space=smem, size = 0x4, offset = 0x4, fixed_abs, tag = 'smem constant byte address 0x4 - core index']
  #allocation1 [shape = 'u32[144,128]{1,0:T(1,128)}', space=vmem, size = 0x12000, scoped, tag = 'internal scratch']
  %s0 = inlined_call_operand.hbm [shape: f32[8,32], index: 0, kind: input, shape index: {}]
  %s1 = inlined_call_operand.hbm [shape: f32[8,128], index: 1, kind: input, shape index: {}]
  %s2 = inlined_call_operand.hbm [shape: f32[32,384], index: 2, kind: input, shape index: {}]
  %s3 = inlined_call_operand.hbm [shape: f32[128,256], index: 3, kind: input, shape index: {}]
  %s4 = inlined_call_operand.vmem [shape: f32[1,32], index: 4, kind: input, shape index: {}]
  %s5 = inlined_call_operand.vmem [shape: f32[1,256], index: 5, kind: input, shape index: {}]
  %s6 = inlined_call_operand.vmem [shape: f32[1,32], index: 6, kind: input, shape index: {}]
  %s7 = inlined_call_operand.hbm [shape: f32[256,128], index: 7, kind: input, shape index: {}]
  %s8 = inlined_call_operand.vmem [shape: f32[1,2], index: 8, kind: input, shape index: {}]
  %s9 = inlined_call_operand.hbm [shape: f32[8,8], index: 9, kind: output, shape index: {}]
  %s10 = sld [smem:[#allocation0]]
  $region70: #{tpu_custom_call.1} parent=0
    _
  %s12 = ssub.s32 1, %s10
  %s13 = scalar_select 0, %s12, %s10
  $region1: #{tpu_custom_call.1} parent=0
    #allocation2 [shape = 'u8[4096]{0}', space=vmem, size = 0x1000, scoped, tag = 'input window, operand 0, single buffered']
    #allocation3 [shape = 's32[1]{0}', space=sflag, size = 0x4, scoped, tag = 'scoped memory for tpu_custom_call.1']
    #allocation4 [shape = 's32[1]{0}', space=sflag, size = 0x4, scoped, tag = 'scoped memory for tpu_custom_call.1']
    #allocation5 [shape = 's32[1]{0}', space=sflag, size = 0x4, scoped, tag = 'scoped memory for tpu_custom_call.1']
    #allocation6 [shape = 'u8[4096]{0}', space=vmem, size = 0x1000, scoped, tag = 'input window, operand 1, single buffered']
    #allocation7 [shape = 's32[1]{0}', space=sflag, size = 0x4, scoped, tag = 'scoped memory for tpu_custom_call.1']
    #allocation8 [shape = 'u8[49152]{0}', space=vmem, size = 0xc000, scoped, tag = 'input window, operand 2, single buffered']
    #allocation9 [shape = 'u8[131072]{0}', space=vmem, size = 0x20000, scoped, tag = 'input window, operand 3, single buffered']
    #allocation10 [shape = 's32[1]{0}', space=sflag, size = 0x4, scoped, tag = 'scoped memory for tpu_custom_call.1']
    #allocation11 [shape = 'u8[131072]{0}', space=vmem, size = 0x20000, scoped, tag = 'input window, operand 7, single buffered']
    #allocation12 [shape = 'u8[512]{0}', space=smem, size = 0x200, scoped, tag = 'input window, operand 8, single buffered']
    #allocation13 [shape = 'u8[4096]{0}', space=vmem, size = 0x1000, scoped, tag = 'output window, operand 0, single buffered']
    %14 = vsyncpa [#allocation3], 0
    %15 = vsyncpa [#allocation7], 0
    %16 = vsyncpa [#allocation10], 0
    %17 = vsyncpa [#allocation5], 0
    %18 = vsyncpa [#allocation4], 0
    // Predicated region
    $region2: #{tpu_custom_call.1} parent=1 // pred_check
      _
    $region3: #{tpu_custom_call.1} parent=1 // pred_check_branch
      %20 = sbr.rel (0) target = $region5
    $region4: #{tpu_custom_call.1} parent=1 // pred_region
      %s22 = ssub.s32 128, 128
      %23 = vsyncadd [#allocation3], %s22
      %s25 = sshll.u32 [#allocation2], 4
      %s26 = int_to_ptr.vmem [resolvable:$true] %s25
      %28 = dma.hbm_to_vmem [thread:$0]  %s0, 128, %s26, [#allocation3]
    $region5: #{tpu_custom_call.1} parent=1 // pred_fallthru
      _
    // Predicated region
    $region6: #{tpu_custom_call.1} parent=1 // pred_check
      _
    $region7: #{tpu_custom_call.1} parent=1 // pred_check_branch
      %30 = sbr.rel (0) target = $region9
    $region8: #{tpu_custom_call.1} parent=1 // pred_region
      %s32 = ssub.s32 128, 128
      %33 = vsyncadd [#allocation7], %s32
      %s35 = sshll.u32 [#allocation6], 4
      %s36 = int_to_ptr.vmem [resolvable:$true] %s35
      %38 = dma.hbm_to_vmem [thread:$0]  %s1, 128, %s36, [#allocation7]
    $region9: #{tpu_custom_call.1} parent=1 // pred_fallthru
      _
    // Predicated region
    $region10: #{tpu_custom_call.1} parent=1 // pred_check
      _
    $region11: #{tpu_custom_call.1} parent=1 // pred_check_branch
      %40 = sbr.rel (0) target = $region13
    $region12: #{tpu_custom_call.1} parent=1 // pred_region
      %s42 = ssub.s32 1536, 1536
      %43 = vsyncadd [#allocation7], %s42
      %s44 = sshll.u32 [#allocation8], 4
      %s45 = int_to_ptr.vmem [resolvable:$true] %s44
      %50 = dma.hbm_to_vmem [thread:$0]  %s2, 1536, %s45, [#allocation7], 384, 384, 24
    $region13: #{tpu_custom_call.1} parent=1 // pred_fallthru
      _
    // Predicated region
    $region14: #{tpu_custom_call.1} parent=1 // pred_check
      _
    $region15: #{tpu_custom_call.1} parent=1 // pred_check_branch
      %52 = sbr.rel (0) target = $region17
    $region16: #{tpu_custom_call.1} parent=1 // pred_region
      %s54 = ssub.s32 4096, 4096
      %55 = vsyncadd [#allocation10], %s54
      %s56 = sshll.u32 [#allocation9], 4
      %s57 = int_to_ptr.vmem [resolvable:$true] %s56
      %62 = dma.hbm_to_vmem [thread:$0]  %s3, 4096, %s57, [#allocation10], 256, 256, 16
    $region17: #{tpu_custom_call.1} parent=1 // pred_fallthru
      _
    // Predicated region
    $region18: #{tpu_custom_call.1} parent=1 // pred_check
      _
    $region19: #{tpu_custom_call.1} parent=1 // pred_check_branch
      %64 = sbr.rel (0) target = $region21
    $region20: #{tpu_custom_call.1} parent=1 // pred_region
      _
    $region21: #{tpu_custom_call.1} parent=1 // pred_fallthru
      _
    // Predicated region
    $region22: #{tpu_custom_call.1} parent=1 // pred_check
      _
    $region23: #{tpu_custom_call.1} parent=1 // pred_check_branch
      %66 = sbr.rel (0) target = $region25
    $region24: #{tpu_custom_call.1} parent=1 // pred_region
      _
    $region25: #{tpu_custom_call.1} parent=1 // pred_fallthru
      _
    // Predicated region
    $region26: #{tpu_custom_call.1} parent=1 // pred_check
      _
    $region27: #{tpu_custom_call.1} parent=1 // pred_check_branch
      %68 = sbr.rel (0) target = $region29
    $region28: #{tpu_custom_call.1} parent=1 // pred_region
      _
    $region29: #{tpu_custom_call.1} parent=1 // pred_fallthru
      _
    // Predicated region
    $region30: #{tpu_custom_call.1} parent=1 // pred_check
      _
    $region31: #{tpu_custom_call.1} parent=1 // pred_check_branch
      %70 = sbr.rel (0) target = $region33
    $region32: #{tpu_custom_call.1} parent=1 // pred_region
      %s72 = ssub.s32 4096, 4096
      %73 = vsyncadd [#allocation10], %s72
      %s74 = sshll.u32 [#allocation11], 4
      %s75 = int_to_ptr.vmem [resolvable:$true] %s74
      %80 = dma.hbm_to_vmem [thread:$0]  %s7, 4096, %s75, [#allocation10], 128, 128, 8
    $region33: #{tpu_custom_call.1} parent=1 // pred_fallthru
      _
    // Predicated region
    $region34: #{tpu_custom_call.1} parent=1 // pred_check
      _
    $region35: #{tpu_custom_call.1} parent=1 // pred_check_branch
      %82 = sbr.rel (0) target = $region37
    $region36: #{tpu_custom_call.1} parent=1 // pred_region
      %s84 = ssub.s32 16, 16
      %85 = vsyncadd [#allocation5], %s84
      %s87 = sshll.u32 %s8, 4
      %s88 = int_to_ptr.vmem [resolvable:$true] %s87
      %90 = dma.vmem_to_smem %s88, 16, [#allocation12], [#allocation5]
    $region37: #{tpu_custom_call.1} parent=1 // pred_fallthru
      _
    // Predicated region
    $region38: #{tpu_custom_call.1} parent=1 // pred_check
      _
    $region39: #{tpu_custom_call.1} parent=1 // pred_check_branch
      %92 = sbr.rel (0) target = $region41
    $region40: #{tpu_custom_call.1} parent=1 // pred_region
      %93 = dma.done [#allocation3], 128
    $region41: #{tpu_custom_call.1} parent=1 // pred_fallthru
      _
    // Predicated region
    $region42: #{tpu_custom_call.1} parent=1 // pred_check
      _
    $region43: #{tpu_custom_call.1} parent=1 // pred_check_branch
      %95 = sbr.rel (0) target = $region45
    $region44: #{tpu_custom_call.1} parent=1 // pred_region
      %96 = dma.done [#allocation7], 128
    $region45: #{tpu_custom_call.1} parent=1 // pred_fallthru
      _
    // Predicated region
    $region46: #{tpu_custom_call.1} parent=1 // pred_check
      _
    $region47: #{tpu_custom_call.1} parent=1 // pred_check_branch
      %98 = sbr.rel (0) target = $region49
    $region48: #{tpu_custom_call.1} parent=1 // pred_region
      %99 = dma.done [#allocation7], 1536
    $region49: #{tpu_custom_call.1} parent=1 // pred_fallthru
      _
    // Predicated region
    $region50: #{tpu_custom_call.1} parent=1 // pred_check
      _
    $region51: #{tpu_custom_call.1} parent=1 // pred_check_branch
      %101 = sbr.rel (0) target = $region53
    $region52: #{tpu_custom_call.1} parent=1 // pred_region
      %102 = dma.done [#allocation10], 4096
    $region53: #{tpu_custom_call.1} parent=1 // pred_fallthru
      _
    // Predicated region
    $region54: #{tpu_custom_call.1} parent=1 // pred_check
      _
    $region55: #{tpu_custom_call.1} parent=1 // pred_check_branch
      %104 = sbr.rel (0) target = $region57
    $region56: #{tpu_custom_call.1} parent=1 // pred_region
      %105 = dma.done [#allocation10], 4096
    $region57: #{tpu_custom_call.1} parent=1 // pred_fallthru
      _
    // Predicated region
    $region58: #{tpu_custom_call.1} parent=1 // pred_check
      _
    $region59: #{tpu_custom_call.1} parent=1 // pred_check_branch
      %107 = sbr.rel (0) target = $region61
    $region60: #{tpu_custom_call.1} parent=1 // pred_region
      %108 = dma.done [#allocation5], 16
    $region61: #{tpu_custom_call.1} parent=1 // pred_fallthru
      _
    %109 = sfence
    %v110 = vld [vmem:[#allocation2] sm:$0xff]
    %v111 = vld [vmem:[#allocation6] sm:$0xff]
    %v112 = vld [vmem:[#allocation8] sm:$0xff]
    %v113 = vld [vmem:[#allocation8 + $0x8] sm:$0xff]
    %v114 = vld [vmem:[#allocation8 + $0x10] sm:$0xff]
    %v115 = vld [vmem:[#allocation8 + $0x18] sm:$0xff]
    %v116 = vld [vmem:[#allocation8 + $0x20] sm:$0xff]
    %v117 = vld [vmem:[#allocation8 + $0x28] sm:$0xff]
    %v118 = vld [vmem:[#allocation8 + $0x30] sm:$0xff]
    %v119 = vld [vmem:[#allocation8 + $0x38] sm:$0xff]
    %v120 = vld [vmem:[#allocation8 + $0x40] sm:$0xff]
    %v121 = vld [vmem:[#allocation8 + $0x48] sm:$0xff]
    %v122 = vld [vmem:[#allocation8 + $0x50] sm:$0xff]
    %v123 = vld [vmem:[#allocation8 + $0x58] sm:$0xff]
    %vm124 = vcmask 261120
    %v126 = vsel %vm124, %v110, 0
    %128 = vmatprep.subr.mxu0 0.0
    %129 = vmatpush1.msra.mxu0 0.0
    %130 = vmatprep.subr.mxu0 0.0
    %131 = vmatpush1.msra.mxu0 0.0
    %132 = vmatprep.subr.mxu0 0.0
    %133 = vmatpush1.msra.mxu0 0.0
    %134 = vmatprep.subr.mxu0 0.0
    %135 = vmatpush1.msra.mxu0 0.0
    %136 = vmatprep.subr.mxu0 0.0
    %137 = vmatpush1.msra.mxu0 0.0
    %138 = vmatprep.subr.mxu0 0.0
    %139 = vmatpush1.msra.mxu0 0.0
    %140 = vmatprep.subr.mxu0 0.0
    %141 = vmatpush1.msra.mxu0 0.0
    %142 = vmatprep.subr.mxu0 0.0
    %143 = vmatpush1.msra.mxu0 0.0
    %144 = vmatprep.subr.mxu0 0.0
    %145 = vmatpush1.msra.mxu0 0.0
    %146 = vmatprep.subr.mxu0 0.0
    %147 = vmatpush1.msra.mxu0 0.0
    %148 = vmatprep.subr.mxu0 0.0
    %149 = vmatpush1.msra.mxu0 0.0
    %150 = vmatprep.subr.mxu0 0.0
    %151 = vmatpush1.msra.mxu0 0.0
    %152 = vmatprep.subr.mxu0 %v122
    %153 = vmatpush1.msra.mxu0 %v121
    %154 = vmatprep.subr.mxu0 %v119
    %155 = vmatpush1.msra.mxu0 %v118
    %156 = vmatprep.subr.mxu0 %v116
    %157 = vmatpush1.msra.mxu0 %v115
    %158 = vmatprep.subr.mxu0 %v113
    %159 = vmatpush1.msra.mxu0 %v112
    %160 = vmatprep.subr.mxu0 0.0
    %161 = vmatpush2.msra.mxu0 0.0
    %162 = vmatprep.subr.mxu0 0.0
    %163 = vmatpush2.msra.mxu0 0.0
    %164 = vmatprep.subr.mxu0 0.0
    %165 = vmatpush2.msra.mxu0 0.0
    %166 = vmatprep.subr.mxu0 0.0
    %167 = vmatpush2.msra.mxu0 0.0
    %168 = vmatprep.subr.mxu0 0.0
    %169 = vmatpush2.msra.mxu0 0.0
    %170 = vmatprep.subr.mxu0 0.0
    %171 = vmatpush2.msra.mxu0 0.0
    %172 = vmatprep.subr.mxu0 0.0
    %173 = vmatpush2.msra.mxu0 0.0
    %174 = vmatprep.subr.mxu0 0.0
    %175 = vmatpush2.msra.mxu0 0.0
    %176 = vmatprep.subr.mxu0 0.0
    %177 = vmatpush2.msra.mxu0 0.0
    %178 = vmatprep.subr.mxu0 0.0
    %179 = vmatpush2.msra.mxu0 0.0
    %180 = vmatprep.subr.mxu0 0.0
    %181 = vmatpush2.msra.mxu0 0.0
    %182 = vmatprep.subr.mxu0 0.0
    %183 = vmatpush2.msra.mxu0 0.0
    %184 = vmatprep.subr.mxu0 0.0
    %185 = vmatpush2.msra.mxu0 0.0
    %186 = vmatprep.subr.mxu0 0.0
    %187 = vmatpush2.msra.mxu0 0.0
    %188 = vmatprep.subr.mxu0 0.0
    %189 = vmatpush2.msra.mxu0 0.0
    %190 = vmatprep.subr.mxu0 0.0
    %191 = vmatpush2.msra.mxu0 0.0
    %192 = vmatprep.mubr.f32.mxu0 0.0
    %193 = vmatmul.mubr.f32.gmra.mxu0 %v126
    %v194 = vpop.f32.mrf.mxu0
    %v195 = vadd.f32 0.0, %v194
    %v196 = vpop.f32.mrf.mxu0
    %v197 = vadd.f32 0.0, %v196
    %198 = vdwg.mxu0
    %199 = vmatprep.subr.mxu0 0.0
    %200 = vmatpush1.msra.mxu0 0.0
    %201 = vmatprep.subr.mxu0 0.0
    %202 = vmatpush1.msra.mxu0 0.0
    %203 = vmatprep.subr.mxu0 0.0
    %204 = vmatpush1.msra.mxu0 0.0
    %205 = vmatprep.subr.mxu0 0.0
    %206 = vmatpush1.msra.mxu0 0.0
    %207 = vmatprep.subr.mxu0 0.0
    %208 = vmatpush1.msra.mxu0 0.0
    %209 = vmatprep.subr.mxu0 0.0
    %210 = vmatpush1.msra.mxu0 0.0
    %211 = vmatprep.subr.mxu0 0.0
    %212 = vmatpush1.msra.mxu0 0.0
    %213 = vmatprep.subr.mxu0 0.0
    %214 = vmatpush1.msra.mxu0 0.0
    %215 = vmatprep.subr.mxu0 0.0
    %216 = vmatpush1.msra.mxu0 0.0
    %217 = vmatprep.subr.mxu0 0.0
    %218 = vmatpush1.msra.mxu0 0.0
    %219 = vmatprep.subr.mxu0 0.0
    %220 = vmatpush1.msra.mxu0 0.0
    %221 = vmatprep.subr.mxu0 0.0
    %222 = vmatpush1.msra.mxu0 0.0
    %223 = vmatprep.subr.mxu0 0.0
    %224 = vmatpush1.msra.mxu0 %v123
    %225 = vmatprep.subr.mxu0 0.0
    %226 = vmatpush1.msra.mxu0 %v120
    %227 = vmatprep.subr.mxu0 0.0
    %228 = vmatpush1.msra.mxu0 %v117
    %229 = vmatprep.subr.mxu0 0.0
    %230 = vmatpush1.msra.mxu0 %v114
    %231 = vmatprep.subr.mxu0 0.0
    %232 = vmatpush2.msra.mxu0 0.0
    %233 = vmatprep.subr.mxu0 0.0
    %234 = vmatpush2.msra.mxu0 0.0
    %235 = vmatprep.subr.mxu0 0.0
    %236 = vmatpush2.msra.mxu0 0.0
    %237 = vmatprep.subr.mxu0 0.0
    %238 = vmatpush2.msra.mxu0 0.0
    %239 = vmatprep.subr.mxu0 0.0
    %240 = vmatpush2.msra.mxu0 0.0
    %241 = vmatprep.subr.mxu0 0.0
    %242 = vmatpush2.msra.mxu0 0.0
    %243 = vmatprep.subr.mxu0 0.0
    %244 = vmatpush2.msra.mxu0 0.0
    %245 = vmatprep.subr.mxu0 0.0
    %246 = vmatpush2.msra.mxu0 0.0
    %247 = vmatprep.subr.mxu0 0.0
    %248 = vmatpush2.msra.mxu0 0.0
    %249 = vmatprep.subr.mxu0 0.0
    %250 = vmatpush2.msra.mxu0 0.0
    %251 = vmatprep.subr.mxu0 0.0
    %252 = vmatpush2.msra.mxu0 0.0
    %253 = vmatprep.subr.mxu0 0.0
    %254 = vmatpush2.msra.mxu0 0.0
    %255 = vmatprep.subr.mxu0 0.0
    %256 = vmatpush2.msra.mxu0 0.0
    %257 = vmatprep.subr.mxu0 0.0
    %258 = vmatpush2.msra.mxu0 0.0
    %259 = vmatprep.subr.mxu0 0.0
    %260 = vmatpush2.msra.mxu0 0.0
    %261 = vmatprep.subr.mxu0 0.0
    %262 = vmatpush2.msra.mxu0 0.0
    %263 = vmatprep.mubr.f32.mxu0 0.0
    %264 = vmatmul.mubr.f32.gmra.mxu0 %v126
    %v265 = vpop.f32.mrf.mxu0
    %v266 = vadd.f32 0.0, %v265
    %v267 = vpop.f32.mrf.mxu0
    %268 = vdwg.mxu0
    %v269 = vld [vmem:[%s4] sm:$0x1]
    %v271 = vlaneseq
    %v272 = vshrl.u32 %v271, 7
    %v273 = vsub.s32 0, %v272
    %v274 = vrot.slane %v269, %v273
    %v276 = vadd.f32 %v195, %v274
    %v277 = vmax.f32 %v276, 0.0
    %v278 = vld [vmem:[%s6] sm:$0x1]
    %v280 = vlaneseq
    %v281 = vshrl.u32 %v280, 7
    %v282 = vsub.s32 0, %v281
    %v283 = vrot.slane %v278, %v282
    %v285 = vmul.f32 %v277, %v283
    %v286 = vsel %vm124, %v285, 0.0
    %287 = vadd.xlane.f32.xlu0 %v286
    %v288 = vpop.xlane.xlu0 %287
    %s289 = sld [smem:[#allocation12]]
    %v290 = vstv %s289
    %v291 = vadd.f32 %v288, %v290
    %v292 = vld [vmem:[#allocation9] sm:$0xff]
    %v293 = vld [vmem:[#allocation9 + $0x8] sm:$0xff]
    %v294 = vld [vmem:[#allocation9 + $0x10] sm:$0xff]
    %v295 = vld [vmem:[#allocation9 + $0x18] sm:$0xff]
    %v296 = vld [vmem:[#allocation9 + $0x20] sm:$0xff]
    %v297 = vld [vmem:[#allocation9 + $0x28] sm:$0xff]
    %v298 = vld [vmem:[#allocation9 + $0x30] sm:$0xff]
    %v299 = vld [vmem:[#allocation9 + $0x38] sm:$0xff]
    %v300 = vld [vmem:[#allocation9 + $0x40] sm:$0xff]
    %v301 = vld [vmem:[#allocation9 + $0x48] sm:$0xff]
    %v302 = vld [vmem:[#allocation9 + $0x50] sm:$0xff]
    %v303 = vld [vmem:[#allocation9 + $0x58] sm:$0xff]
    %v304 = vld [vmem:[#allocation9 + $0x60] sm:$0xff]
    %v305 = vld [vmem:[#allocation9 + $0x68] sm:$0xff]
    %v306 = vld [vmem:[#allocation9 + $0x70] sm:$0xff]
    %v307 = vld [vmem:[#allocation9 + $0x78] sm:$0xff]
    %v308 = vld [vmem:[#allocation9 + $0x80] sm:$0xff]
    %v309 = vld [vmem:[#allocation9 + $0x88] sm:$0xff]
    %v310 = vld [vmem:[#allocation9 + $0x90] sm:$0xff]
    %v311 = vld [vmem:[#allocation9 + $0x98] sm:$0xff]
    %v312 = vld [vmem:[#allocation9 + $0xa0] sm:$0xff]
    %v313 = vld [vmem:[#allocation9 + $0xa8] sm:$0xff]
    %v314 = vld [vmem:[#allocation9 + $0xb0] sm:$0xff]
    %v315 = vld [vmem:[#allocation9 + $0xb8] sm:$0xff]
    %v316 = vld [vmem:[#allocation9 + $0xc0] sm:$0xff]
    %v317 = vld [vmem:[#allocation9 + $0xc8] sm:$0xff]
    %v318 = vld [vmem:[#allocation9 + $0xd0] sm:$0xff]
    %v319 = vld [vmem:[#allocation9 + $0xd8] sm:$0xff]
    %v320 = vld [vmem:[#allocation9 + $0xe0] sm:$0xff]
    %v321 = vld [vmem:[#allocation9 + $0xe8] sm:$0xff]
    %v322 = vld [vmem:[#allocation9 + $0xf0] sm:$0xff]
    %v323 = vld [vmem:[#allocation9 + $0xf8] sm:$0xff]
    %324 = vmatprep.subr.mxu0 %v323
    %325 = vmatpush1.msra.mxu0 %v322
    %326 = vmatprep.subr.mxu0 %v321
    %327 = vmatpush1.msra.mxu0 %v320
    %328 = vmatprep.subr.mxu0 %v319
    %329 = vmatpush1.msra.mxu0 %v318
    %330 = vmatprep.subr.mxu0 %v317
    %331 = vmatpush1.msra.mxu0 %v316
    %332 = vmatprep.subr.mxu0 %v315
    %333 = vmatpush1.msra.mxu0 %v314
    %334 = vmatprep.subr.mxu0 %v313
    %335 = vmatpush1.msra.mxu0 %v312
    %336 = vmatprep.subr.mxu0 %v311
    %337 = vmatpush1.msra.mxu0 %v310
    %338 = vmatprep.subr.mxu0 %v309
    %339 = vmatpush1.msra.mxu0 %v308
    %340 = vmatprep.subr.mxu0 %v307
    %341 = vmatpush1.msra.mxu0 %v306
    %342 = vmatprep.subr.mxu0 %v305
    %343 = vmatpush1.msra.mxu0 %v304
    %344 = vmatprep.subr.mxu0 %v303
    %345 = vmatpush1.msra.mxu0 %v302
    %346 = vmatprep.subr.mxu0 %v301
    %347 = vmatpush1.msra.mxu0 %v300
    %348 = vmatprep.subr.mxu0 %v299
    %349 = vmatpush1.msra.mxu0 %v298
    %350 = vmatprep.subr.mxu0 %v297
    %351 = vmatpush1.msra.mxu0 %v296
    %352 = vmatprep.subr.mxu0 %v295
    %353 = vmatpush1.msra.mxu0 %v294
    %354 = vmatprep.subr.mxu0 %v293
    %355 = vmatpush1.msra.mxu0 %v292
    %356 = vmatprep.subr.mxu0 0.0
    %357 = vmatpush2.msra.mxu0 0.0
    %358 = vmatprep.subr.mxu0 0.0
    %359 = vmatpush2.msra.mxu0 0.0
    %360 = vmatprep.subr.mxu0 0.0
    %361 = vmatpush2.msra.mxu0 0.0
    %362 = vmatprep.subr.mxu0 0.0
    %363 = vmatpush2.msra.mxu0 0.0
    %364 = vmatprep.subr.mxu0 0.0
    %365 = vmatpush2.msra.mxu0 0.0
    %366 = vmatprep.subr.mxu0 0.0
    %367 = vmatpush2.msra.mxu0 0.0
    %368 = vmatprep.subr.mxu0 0.0
    %369 = vmatpush2.msra.mxu0 0.0
    %370 = vmatprep.subr.mxu0 0.0
    %371 = vmatpush2.msra.mxu0 0.0
    %372 = vmatprep.subr.mxu0 0.0
    %373 = vmatpush2.msra.mxu0 0.0
    %374 = vmatprep.subr.mxu0 0.0
    %375 = vmatpush2.msra.mxu0 0.0
    %376 = vmatprep.subr.mxu0 0.0
    %377 = vmatpush2.msra.mxu0 0.0
    %378 = vmatprep.subr.mxu0 0.0
    %379 = vmatpush2.msra.mxu0 0.0
    %380 = vmatprep.subr.mxu0 0.0
    %381 = vmatpush2.msra.mxu0 0.0
    %382 = vmatprep.subr.mxu0 0.0
    %383 = vmatpush2.msra.mxu0 0.0
    %384 = vmatprep.subr.mxu0 0.0
    %385 = vmatpush2.msra.mxu0 0.0
    %386 = vmatprep.subr.mxu0 0.0
    %387 = vmatpush2.msra.mxu0 0.0
    %388 = vmatprep.mubr.f32.mxu0 0.0
    %389 = vmatmul.mubr.f32.gmra.mxu0 %v111
    %v390 = vpop.f32.mrf.mxu0
    %v391 = vadd.f32 %v197, %v390
    %v392 = vpop.f32.mrf.mxu0
    %v393 = vadd.f32 %v266, %v392
    %394 = vdwg.mxu0
    %v395 = vld [vmem:[%s5] sm:$0x3]
    %v397 = vlaneseq
    %v398 = vshrl.u32 %v397, 7
    %v399 = vsub.s32 0, %v398
    %v400 = vrot.slane %v395, %v399
    %v401 = vlaneseq
    %v402 = vshrl.u32 %v401, 7
    %v403 = vsub.s32 1, %v402
    %v404 = vrot.slane %v395, %v403
    %v407 = vadd.f32 %v391, %v400
    %v408 = vadd.f32 %v393, %v404
    %v409 = vmax.f32 %v407, 0.0
    %v410 = vmax.f32 %v408, 0.0
    %v411 = vld [vmem:[#allocation11] sm:$0xff]
    %v412 = vld [vmem:[#allocation11 + $0x8] sm:$0xff]
    %v413 = vld [vmem:[#allocation11 + $0x10] sm:$0xff]
    %v414 = vld [vmem:[#allocation11 + $0x18] sm:$0xff]
    %v415 = vld [vmem:[#allocation11 + $0x20] sm:$0xff]
    %v416 = vld [vmem:[#allocation11 + $0x28] sm:$0xff]
    %v417 = vld [vmem:[#allocation11 + $0x30] sm:$0xff]
    %v418 = vld [vmem:[#allocation11 + $0x38] sm:$0xff]
    %v419 = vld [vmem:[#allocation11 + $0x40] sm:$0xff]
    %v420 = vld [vmem:[#allocation11 + $0x48] sm:$0xff]
    %v421 = vld [vmem:[#allocation11 + $0x50] sm:$0xff]
    %v422 = vld [vmem:[#allocation11 + $0x58] sm:$0xff]
    %v423 = vld [vmem:[#allocation11 + $0x60] sm:$0xff]
    %v424 = vld [vmem:[#allocation11 + $0x68] sm:$0xff]
    %v425 = vld [vmem:[#allocation11 + $0x70] sm:$0xff]
    %v426 = vld [vmem:[#allocation11 + $0x78] sm:$0xff]
    %v427 = vld [vmem:[#allocation11 + $0x80] sm:$0xff]
    %v428 = vld [vmem:[#allocation11 + $0x88] sm:$0xff]
    %v429 = vld [vmem:[#allocation11 + $0x90] sm:$0xff]
    %v430 = vld [vmem:[#allocation11 + $0x98] sm:$0xff]
    %v431 = vld [vmem:[#allocation11 + $0xa0] sm:$0xff]
    %v432 = vld [vmem:[#allocation11 + $0xa8] sm:$0xff]
    %v433 = vld [vmem:[#allocation11 + $0xb0] sm:$0xff]
    %v434 = vld [vmem:[#allocation11 + $0xb8] sm:$0xff]
    %v435 = vld [vmem:[#allocation11 + $0xc0] sm:$0xff]
    %v436 = vld [vmem:[#allocation11 + $0xc8] sm:$0xff]
    %v437 = vld [vmem:[#allocation11 + $0xd0] sm:$0xff]
    %v438 = vld [vmem:[#allocation11 + $0xd8] sm:$0xff]
    %v439 = vld [vmem:[#allocation11 + $0xe0] sm:$0xff]
    %v440 = vld [vmem:[#allocation11 + $0xe8] sm:$0xff]
    %v441 = vld [vmem:[#allocation11 + $0xf0] sm:$0xff]
    %v442 = vld [vmem:[#allocation11 + $0xf8] sm:$0xff]
    %443 = vmatprep.subr.mxu0 0.0
    %444 = vmatpush1.msra.mxu0 %v426
    %445 = vmatprep.subr.mxu0 0.0
    %446 = vmatpush1.msra.mxu0 %v425
    %447 = vmatprep.subr.mxu0 0.0
    %448 = vmatpush1.msra.mxu0 %v424
    %449 = vmatprep.subr.mxu0 0.0
    %450 = vmatpush1.msra.mxu0 %v423
    %451 = vmatprep.subr.mxu0 0.0
    %452 = vmatpush1.msra.mxu0 %v422
    %453 = vmatprep.subr.mxu0 0.0
    %454 = vmatpush1.msra.mxu0 %v421
    %455 = vmatprep.subr.mxu0 0.0
    %456 = vmatpush1.msra.mxu0 %v420
    %457 = vmatprep.subr.mxu0 0.0
    %458 = vmatpush1.msra.mxu0 %v419
    %459 = vmatprep.subr.mxu0 0.0
    %460 = vmatpush1.msra.mxu0 %v418
    %461 = vmatprep.subr.mxu0 0.0
    %462 = vmatpush1.msra.mxu0 %v417
    %463 = vmatprep.subr.mxu0 0.0
    %464 = vmatpush1.msra.mxu0 %v416
    %465 = vmatprep.subr.mxu0 0.0
    %466 = vmatpush1.msra.mxu0 %v415
    %467 = vmatprep.subr.mxu0 0.0
    %468 = vmatpush1.msra.mxu0 %v414
    %469 = vmatprep.subr.mxu0 0.0
    %470 = vmatpush1.msra.mxu0 %v413
    %471 = vmatprep.subr.mxu0 0.0
    %472 = vmatpush1.msra.mxu0 %v412
    %473 = vmatprep.subr.mxu0 0.0
    %474 = vmatpush1.msra.mxu0 %v411
    %475 = vmatprep.subr.mxu0 0.0
    %476 = vmatpush2.msra.mxu0 %v442
    %477 = vmatprep.subr.mxu0 0.0
    %478 = vmatpush2.msra.mxu0 %v441
    %479 = vmatprep.subr.mxu0 0.0
    %480 = vmatpush2.msra.mxu0 %v440
    %481 = vmatprep.subr.mxu0 0.0
    %482 = vmatpush2.msra.mxu0 %v439
    %483 = vmatprep.subr.mxu0 0.0
    %484 = vmatpush2.msra.mxu0 %v438
    %485 = vmatprep.subr.mxu0 0.0
    %486 = vmatpush2.msra.mxu0 %v437
    %487 = vmatprep.subr.mxu0 0.0
    %488 = vmatpush2.msra.mxu0 %v436
    %489 = vmatprep.subr.mxu0 0.0
    %490 = vmatpush2.msra.mxu0 %v435
    %491 = vmatprep.subr.mxu0 0.0
    %492 = vmatpush2.msra.mxu0 %v434
    %493 = vmatprep.subr.mxu0 0.0
    %494 = vmatpush2.msra.mxu0 %v433
    %495 = vmatprep.subr.mxu0 0.0
    %496 = vmatpush2.msra.mxu0 %v432
    %497 = vmatprep.subr.mxu0 0.0
    %498 = vmatpush2.msra.mxu0 %v431
    %499 = vmatprep.subr.mxu0 0.0
    %500 = vmatpush2.msra.mxu0 %v430
    %501 = vmatprep.subr.mxu0 0.0
    %502 = vmatpush2.msra.mxu0 %v429
    %503 = vmatprep.subr.mxu0 0.0
    %504 = vmatpush2.msra.mxu0 %v428
    %505 = vmatprep.subr.mxu0 0.0
    %506 = vmatpush2.msra.mxu0 %v427
    %507 = vmatprep.mubr.f32.mxu0 %v410
    %508 = vmatmul.mubr.f32.gmra.mxu0 %v409
    %v509 = vpop.f32.mrf.mxu0
    %v510 = vadd.f32 0.0, %v509
    %v511 = vpop.f32.mrf.mxu0
    %512 = vdwg.mxu0
    %s513 = sld [smem:[#allocation12 + $0x1]]
    %v514 = vstv %s513
    %v515 = vadd.f32 %v510, %v514
    %v516 = vadd.f32 %v515, %v291
    %vm517 = vcmask 64512
    %v518 = vsel %vm517, %v515, 0.0
    %519 = vadd.xlane.f32.xlu0 %v518
    %v520 = vpop.xlane.xlu0 %519
    %v521 = vrcp.pop 8.0
    %v522 = vmul.f32 %v520, %v521
    %v523 = vsub.f32 %v516, %v522
    %524 = vxpose.xlu0.b32.start [1/16] %v523, 128
    %525 = vxpose.xlu0.b32.cont [2/16] 0.0, 128
    %526 = vxpose.xlu0.b32.cont [3/16] 0.0, 128
    %527 = vxpose.xlu0.b32.cont [4/16] 0.0, 128
    %528 = vxpose.xlu0.b32.cont [5/16] 0.0, 128
    %529 = vxpose.xlu0.b32.cont [6/16] 0.0, 128
    %530 = vxpose.xlu0.b32.cont [7/16] 0.0, 128
    %531 = vxpose.xlu0.b32.cont [8/16] 0.0, 128
    %532 = vxpose.xlu0.b32.cont [9/16] 0.0, 128
    %533 = vxpose.xlu0.b32.cont [10/16] 0.0, 128
    %534 = vxpose.xlu0.b32.cont [11/16] 0.0, 128
    %535 = vxpose.xlu0.b32.cont [12/16] 0.0, 128
    %536 = vxpose.xlu0.b32.cont [13/16] 0.0, 128
    %537 = vxpose.xlu0.b32.cont [14/16] 0.0, 128
    %538 = vxpose.xlu0.b32.cont [15/16] 0.0, 128
    %539 = vxpose.xlu0.b32.end [16/16] 0.0, 128
    %v540 = vpop.trf.xlu0
    %v541 = vpop.trf.xlu0
    %v542 = vpop.trf.xlu0
    %v543 = vpop.trf.xlu0
    %v544 = vpop.trf.xlu0
    %v545 = vpop.trf.xlu0
    %v546 = vpop.trf.xlu0
    %v547 = vpop.trf.xlu0
    %v548 = vpop.trf.xlu0
    %v549 = vpop.trf.xlu0
    %v550 = vpop.trf.xlu0
    %v551 = vpop.trf.xlu0
    %v552 = vpop.trf.xlu0
    %v553 = vpop.trf.xlu0
    %v554 = vpop.trf.xlu0
    %v555 = vpop.trf.xlu0
    %556 = vst.msk [vmem:[#allocation13] sm:$0xff] %vm517, %v540
    // Predicated region
    $region62: #{tpu_custom_call.1} parent=1 // pred_check
      _
    $region63: #{tpu_custom_call.1} parent=1 // pred_check_branch
      %558 = sbr.rel (0) target = $region65
    $region64: #{tpu_custom_call.1} parent=1 // pred_region
      %s560 = ssub.s32 128, 128
      %561 = vsyncadd [#allocation4], %s560
      %s563 = sshll.u32 [#allocation13], 4
      %s564 = int_to_ptr.vmem [resolvable:$true] %s563
      %566 = dma.vmem_to_hbm [thread:$0]  %s564, 128, %s9, [#allocation4]
    $region65: #{tpu_custom_call.1} parent=1 // pred_fallthru
      _
    // Predicated region
    $region66: #{tpu_custom_call.1} parent=1 // pred_check
      _
    $region67: #{tpu_custom_call.1} parent=1 // pred_check_branch
      %568 = sbr.rel (0) target = $region69
    $region68: #{tpu_custom_call.1} parent=1 // pred_region
      %569 = dma.done [#allocation4], 128
    $region69: #{tpu_custom_call.1} parent=1 // pred_fallthru
      _
    %570 = vsyncpa [#allocation3], 1
    %571 = vsyncpa [#allocation7], 1
    %572 = vsyncpa [#allocation10], 1
    %573 = vsyncpa [#allocation4], 1
    %574 = vsyncpa [#allocation5], 1

</llo_original>
